<compile_context>
chip_gen: v5e
topology: v5e:2x2
jax: 0.10.0
libtpu: 0.0.40
codegen_flags: <defaults>
</compile_context>

<pallas_src>
import jax
import jax.numpy as jnp
from jax.experimental import pallas as pl
from jax.experimental.pallas import tpu as pltpu

INPUT_DIM = 600
H1 = 256
H2 = 128
HEAD_DIMS = {"gender": 1, "handed": 1, "years": 3, "level": 4}
HEADS_TOTAL = sum(HEAD_DIMS.values())   # 9
OUT_PAD = 128                           # lane-dense fused-head output slab
TILE_B = 256                            # 256-row tiles: ~85% of HBM roofline,
                                        # >=2 grid steps for realistic batches


def _mlp_kernel(x_ref, w1_ref, b1_ref, w2_ref, b2_ref, wh_ref, bh_ref, a_ref,
                out_ref):
    # Cast the f32 activation stream to bf16 on the VPU (MXU operand dtype).
    xb = x_ref[...].astype(jnp.bfloat16)

    # Layer 1: Linear(600 -> 256). bf16 x bf16 on the MXU, f32 accumulation.
    h1 = jnp.dot(xb, w1_ref[...],
                 preferred_element_type=jnp.float32) + b1_ref[...]
    # PReLU(a1) in f32 on the VPU.
    a1 = a_ref[0]
    h1 = jnp.where(h1 > 0, h1, a1 * h1)

    # Dropout(0.3): identity at inference.

    # Layer 2: Linear(256 -> 128) + PReLU(a2).
    h2 = jnp.dot(h1.astype(jnp.bfloat16), w2_ref[...],
                 preferred_element_type=jnp.float32) + b2_ref[...]
    a2 = a_ref[1]
    h2 = jnp.where(h2 > 0, h2, a2 * h2)

    # Fused heads: Linear(128 -> 128); only columns 0:9 are real, the rest
    # are zero padding so the store is a full-lane (unmasked) vst.
    out_ref[...] = (jnp.dot(h2.astype(jnp.bfloat16), wh_ref[...],
                            preferred_element_type=jnp.float32)
                    + bh_ref[...]).astype(out_ref.dtype)


def mlp_classifier_forward(x, params):
    """x: [B, INPUT_DIM] float32 -> dict of head outputs (f32)."""
    B = x.shape[0]

    # Batch tile: whole batch if small (block == full dims, exempt from the
    # (8,128) rule), else 256-row tiles with a ragged last tile via cdiv.
    tile_b = B if B <= TILE_B else TILE_B
    grid = (pl.cdiv(B, tile_b),)

    resident = lambda i: (0, 0)   # weights/biases stay put across grid steps

    flops = 2 * B * (INPUT_DIM * H1 + H1 * H2 + H2 * OUT_PAD)
    bytes_accessed = (
        x.size * 4
        + (params["w1"].size + params["w2"].size + params["wh"].size) * 2
        + (params["b1"].size + params["b2"].size + params["bh"].size) * 4
        + B * OUT_PAD * 2)

    out = pl.pallas_call(
        _mlp_kernel,
        out_shape=jax.ShapeDtypeStruct((B, OUT_PAD), jnp.bfloat16),
        grid=grid,
        in_specs=[
            pl.BlockSpec((tile_b, INPUT_DIM), lambda i: (i, 0)),  # x (tiled)
            pl.BlockSpec((INPUT_DIM, H1), resident),              # w1
            pl.BlockSpec((1, H1), resident),                      # b1
            pl.BlockSpec((H1, H2), resident),                     # w2
            pl.BlockSpec((1, H2), resident),                      # b2
            pl.BlockSpec((H2, OUT_PAD), resident),                # wh (fused heads)
            pl.BlockSpec((1, OUT_PAD), resident),                 # bh
            pl.BlockSpec(memory_space=pltpu.MemorySpace.SMEM),    # prelu alphas
        ],
        out_specs=pl.BlockSpec((tile_b, OUT_PAD), lambda i: (i, 0)),
        compiler_params=pltpu.CompilerParams(
            dimension_semantics=("parallel",)),
        cost_estimate=pl.CostEstimate(
            flops=flops, transcendentals=0, bytes_accessed=bytes_accessed),
    )(x,
      params["w1"], params["b1"],
      params["w2"], params["b2"],
      params["wh"], params["bh"],
      params["alphas"])

    # Wrapper glue: slice the 9 real logit columns and upcast to f32.
    out = out[:, :HEADS_TOTAL].astype(jnp.float32)
    return {
        "gender": out[:, 0:1],
        "handed": out[:, 1:2],
        "years": out[:, 2:5],
        "level": out[:, 5:9],
    }


def init_params(key):
    """Deterministic init matching MLPClassifier(input_dim=600) shapes.

    Weights are pre-transposed to [in, out] and stored in bf16 (matmul
    operands); biases stay f32.  The four heads are fused along the output
    axis and zero-padded to 128 lanes.
    """
    ks = jax.random.split(key, 12)

    def linear(kw, kb, fan_in, fan_out):
        bound = 1.0 / jnp.sqrt(fan_in)
        w = jax.random.uniform(kw, (fan_in, fan_out), jnp.float32, -bound, bound)
        b = jax.random.uniform(kb, (1, fan_out), jnp.float32, -bound, bound)
        return w, b

    w1, b1 = linear(ks[0], ks[1], INPUT_DIM, H1)
    w2, b2 = linear(ks[2], ks[3], H1, H2)
    wg, bg = linear(ks[4], ks[5], H2, 1)
    wh_, bh_ = linear(ks[6], ks[7], H2, 1)
    wy, by = linear(ks[8], ks[9], H2, 3)
    wl, bl = linear(ks[10], ks[11], H2, 4)

    # Fuse the 4 heads along the output-feature axis: [128, 9], [1, 9].
    wh = jnp.concatenate([wg, wh_, wy, wl], axis=1)
    bh = jnp.concatenate([bg, bh_, by, bl], axis=1)

    # Pad head columns 9 -> 128 with zeros (lane-dense output slab).
    whp = jnp.zeros((H2, OUT_PAD), jnp.float32).at[:, :HEADS_TOTAL].set(wh)
    bhp = jnp.zeros((1, OUT_PAD), jnp.float32).at[:, :HEADS_TOTAL].set(bh)

    return {
        "w1": w1.astype(jnp.bfloat16), "b1": b1,
        "w2": w2.astype(jnp.bfloat16), "b2": b2,
        "wh": whp.astype(jnp.bfloat16), "bh": bhp,
        # PReLU default init: single alpha = 0.25 per layer.
        "alphas": jnp.array([0.25, 0.25], dtype=jnp.float32),
    }


def _reference_forward(x, p):
    """Pure-JAX reference matching the kernel's bf16-operand / f32-acc numerics."""
    hp = jax.lax.Precision.HIGHEST
    w1 = p["w1"].astype(jnp.float32)
    w2 = p["w2"].astype(jnp.float32)
    wh = p["wh"].astype(jnp.float32)[:, :HEADS_TOTAL]
    bh = p["bh"][:, :HEADS_TOTAL]

    xb = x.astype(jnp.bfloat16).astype(jnp.float32)
    h1 = jnp.dot(xb, w1, precision=hp) + p["b1"]
    h1 = jnp.where(h1 > 0, h1, p["alphas"][0] * h1)
    h1 = h1.astype(jnp.bfloat16).astype(jnp.float32)
    h2 = jnp.dot(h1, w2, precision=hp) + p["b2"]
    h2 = jnp.where(h2 > 0, h2, p["alphas"][1] * h2)
    h2 = h2.astype(jnp.bfloat16).astype(jnp.float32)
    out = jnp.dot(h2, wh, precision=hp) + bh
    return {"gender": out[:, 0:1], "handed": out[:, 1:2],
            "years": out[:, 2:5], "level": out[:, 5:9]}


if __name__ == "__main__":
    key = jax.random.PRNGKey(0)
    k_param, k_x = jax.random.split(key)

    params = init_params(k_param)
    B = 2
    x = jax.random.normal(k_x, (B, INPUT_DIM), dtype=jnp.float32)

    outs = mlp_classifier_forward(x, params)
    outs = jax.tree_util.tree_map(jax.block_until_ready, outs)

    ref = _reference_forward(x, params)
    for name in ("gender", "handed", "years", "level"):
        assert outs[name].shape == ref[name].shape, name
        # Kernel output passes through a bf16 store; allow bf16-level tolerance.
        assert jnp.allclose(outs[name], ref[name], atol=2e-2, rtol=2e-2), name

    print("KERNEL_OK")
</pallas_src>

<mosaic_0001>
module attributes {stable_mosaic.version = 11 : i64} {
  func.func @_mlp_kernel(%arg0: i32, %arg1: memref<2x600xf32, #tpu.memory_space<vmem>>, %arg2: memref<600x256xbf16, #tpu.memory_space<vmem>>, %arg3: memref<1x256xf32, #tpu.memory_space<vmem>>, %arg4: memref<256x128xbf16, #tpu.memory_space<vmem>>, %arg5: memref<1x128xf32, #tpu.memory_space<vmem>>, %arg6: memref<128x128xbf16, #tpu.memory_space<vmem>>, %arg7: memref<1x128xf32, #tpu.memory_space<vmem>>, %arg8: memref<2xf32, #tpu.memory_space<smem>>, %arg9: memref<2x128xbf16, #tpu.memory_space<vmem>>) attributes {dimension_semantics = [#tpu.dimension_semantics<parallel>], iteration_bounds = array<i64: 1>, scalar_prefetch = 0 : i64, scratch_operands = 0 : i64, tpu.core_type = #tpu.core_type<tc>, window_params = [{transform_indices = @transform_0, window_bounds = array<i64: 2, 600>}, {pipeline_mode = #tpu.pipeline_mode<synchronous>, transform_indices = @transform_1, window_bounds = array<i64: 600, 256>}, {pipeline_mode = #tpu.pipeline_mode<synchronous>, transform_indices = @transform_2, window_bounds = array<i64: 1, 256>}, {pipeline_mode = #tpu.pipeline_mode<synchronous>, transform_indices = @transform_3, window_bounds = array<i64: 256, 128>}, {pipeline_mode = #tpu.pipeline_mode<synchronous>, transform_indices = @transform_4, window_bounds = array<i64: 1, 128>}, {pipeline_mode = #tpu.pipeline_mode<synchronous>, transform_indices = @transform_5, window_bounds = array<i64: 128, 128>}, {pipeline_mode = #tpu.pipeline_mode<synchronous>, transform_indices = @transform_6, window_bounds = array<i64: 1, 128>}, {transform_indices = @transform_7, window_bounds = array<i64: 2>}, {transform_indices = @transform_8, window_bounds = array<i64: 2, 128>}]} {
    %c0 = arith.constant 0 : index
    %c0_0 = arith.constant 0 : index
    %0 = vector.load %arg1[%c0, %c0_0] : memref<2x600xf32, #tpu.memory_space<vmem>>, vector<2x600xf32>
    %1 = arith.truncf %0 : vector<2x600xf32> to vector<2x600xbf16>
    %c0_1 = arith.constant 0 : index
    %c0_2 = arith.constant 0 : index
    %2 = vector.load %arg2[%c0_1, %c0_2] : memref<600x256xbf16, #tpu.memory_space<vmem>>, vector<600x256xbf16>
    %cst = arith.constant dense<0.000000e+00> : vector<2x256xf32>
    %3 = tpu.matmul %1, %2, %cst {dimension_numbers = #tpu.dot_dimension_numbers<[1], [0], [0], [1], [0, 0, 1, 1], [], []>} : vector<2x600xbf16>, vector<600x256xbf16>, vector<2x256xf32> -> vector<2x256xf32>
    %c0_3 = arith.constant 0 : index
    %c0_4 = arith.constant 0 : index
    %4 = vector.load %arg3[%c0_3, %c0_4] : memref<1x256xf32, #tpu.memory_space<vmem>>, vector<1x256xf32>
    %5 = vector.broadcast %4 : vector<1x256xf32> to vector<2x256xf32>
    %6 = arith.addf %3, %5 : vector<2x256xf32>
    %c0_5 = arith.constant 0 : index
    %7 = memref.load %arg8[%c0_5] : memref<2xf32, #tpu.memory_space<smem>>
    %cst_6 = arith.constant 0.000000e+00 : f32
    %8 = vector.broadcast %cst_6 : f32 to vector<2x256xf32>
    %9 = arith.cmpf ogt, %6, %8 : vector<2x256xf32>
    %10 = vector.broadcast %7 : f32 to vector<2x256xf32>
    %11 = arith.mulf %10, %6 : vector<2x256xf32>
    %12 = arith.select %9, %6, %11 : vector<2x256xi1>, vector<2x256xf32>
    %13 = arith.truncf %12 : vector<2x256xf32> to vector<2x256xbf16>
    %c0_7 = arith.constant 0 : index
    %c0_8 = arith.constant 0 : index
    %14 = vector.load %arg4[%c0_7, %c0_8] : memref<256x128xbf16, #tpu.memory_space<vmem>>, vector<256x128xbf16>
    %cst_9 = arith.constant dense<0.000000e+00> : vector<2x128xf32>
    %15 = tpu.matmul %13, %14, %cst_9 {dimension_numbers = #tpu.dot_dimension_numbers<[1], [0], [0], [1], [0, 0, 1, 1], [], []>} : vector<2x256xbf16>, vector<256x128xbf16>, vector<2x128xf32> -> vector<2x128xf32>
    %c0_10 = arith.constant 0 : index
    %c0_11 = arith.constant 0 : index
    %16 = vector.load %arg5[%c0_10, %c0_11] : memref<1x128xf32, #tpu.memory_space<vmem>>, vector<1x128xf32>
    %17 = vector.broadcast %16 : vector<1x128xf32> to vector<2x128xf32>
    %18 = arith.addf %15, %17 : vector<2x128xf32>
    %c1 = arith.constant 1 : index
    %19 = memref.load %arg8[%c1] : memref<2xf32, #tpu.memory_space<smem>>
    %cst_12 = arith.constant 0.000000e+00 : f32
    %20 = vector.broadcast %cst_12 : f32 to vector<2x128xf32>
    %21 = arith.cmpf ogt, %18, %20 : vector<2x128xf32>
    %22 = vector.broadcast %19 : f32 to vector<2x128xf32>
    %23 = arith.mulf %22, %18 : vector<2x128xf32>
    %24 = arith.select %21, %18, %23 : vector<2x128xi1>, vector<2x128xf32>
    %25 = arith.truncf %24 : vector<2x128xf32> to vector<2x128xbf16>
    %c0_13 = arith.constant 0 : index
    %c0_14 = arith.constant 0 : index
    %26 = vector.load %arg6[%c0_13, %c0_14] : memref<128x128xbf16, #tpu.memory_space<vmem>>, vector<128x128xbf16>
    %cst_15 = arith.constant dense<0.000000e+00> : vector<2x128xf32>
    %27 = tpu.matmul %25, %26, %cst_15 {dimension_numbers = #tpu.dot_dimension_numbers<[1], [0], [0], [1], [0, 0, 1, 1], [], []>} : vector<2x128xbf16>, vector<128x128xbf16>, vector<2x128xf32> -> vector<2x128xf32>
    %c0_16 = arith.constant 0 : index
    %c0_17 = arith.constant 0 : index
    %28 = vector.load %arg7[%c0_16, %c0_17] : memref<1x128xf32, #tpu.memory_space<vmem>>, vector<1x128xf32>
    %29 = vector.broadcast %28 : vector<1x128xf32> to vector<2x128xf32>
    %30 = arith.addf %27, %29 : vector<2x128xf32>
    %31 = arith.truncf %30 : vector<2x128xf32> to vector<2x128xbf16>
    %c0_18 = arith.constant 0 : index
    %c0_19 = arith.constant 0 : index
    %32 = vector.load %arg9[%c0_18, %c0_19] : memref<2x128xbf16, #tpu.memory_space<vmem>>, vector<2x128xbf16>
    tpu.vector_store %arg9[%c0_18, %c0_19], %31 {strides = array<i32>} : memref<2x128xbf16, #tpu.memory_space<vmem>>, vector<2x128xbf16>,
    return
  }
  func.func @transform_0(%arg0: i32) -> (i32, i32) {
    %c0_i32 = arith.constant 0 : i32
    %c0_i32_0 = arith.constant 0 : i32
    return %arg0, %c0_i32 : i32, i32
  }
  func.func @transform_1(%arg0: i32) -> (i32, i32) {
    %c0_i32 = arith.constant 0 : i32
    %c0_i32_0 = arith.constant 0 : i32
    %c0_i32_1 = arith.constant 0 : i32
    return %c0_i32, %c0_i32_0 : i32, i32
  }
  func.func @transform_2(%arg0: i32) -> (i32, i32) {
    %c0_i32 = arith.constant 0 : i32
    %c0_i32_0 = arith.constant 0 : i32
    %c0_i32_1 = arith.constant 0 : i32
    return %c0_i32, %c0_i32_0 : i32, i32
  }
  func.func @transform_3(%arg0: i32) -> (i32, i32) {
    %c0_i32 = arith.constant 0 : i32
    %c0_i32_0 = arith.constant 0 : i32
    %c0_i32_1 = arith.constant 0 : i32
    return %c0_i32, %c0_i32_0 : i32, i32
  }
  func.func @transform_4(%arg0: i32) -> (i32, i32) {
    %c0_i32 = arith.constant 0 : i32
    %c0_i32_0 = arith.constant 0 : i32
    %c0_i32_1 = arith.constant 0 : i32
    return %c0_i32, %c0_i32_0 : i32, i32
  }
  func.func @transform_5(%arg0: i32) -> (i32, i32) {
    %c0_i32 = arith.constant 0 : i32
    %c0_i32_0 = arith.constant 0 : i32
    %c0_i32_1 = arith.constant 0 : i32
    return %c0_i32, %c0_i32_0 : i32, i32
  }
  func.func @transform_6(%arg0: i32) -> (i32, i32) {
    %c0_i32 = arith.constant 0 : i32
    %c0_i32_0 = arith.constant 0 : i32
    %c0_i32_1 = arith.constant 0 : i32
    return %c0_i32, %c0_i32_0 : i32, i32
  }
  func.func @transform_7(%arg0: i32) -> i32 {
    %c0_i32 = arith.constant 0 : i32
    %c0_i32_0 = arith.constant 0 : i32
    return %c0_i32 : i32
  }
  func.func @transform_8(%arg0: i32) -> (i32, i32) {
    %c0_i32 = arith.constant 0 : i32
    %c0_i32_0 = arith.constant 0 : i32
    return %arg0, %c0_i32 : i32, i32
  }
}

</mosaic_0001>

<llo_original>
// kernel: tpu_custom_call.1
$region0: #{tpu_custom_call.1}
  #allocation0 [shape = 'u32[]', space=smem, size = 0x4, offset = 0x4, fixed_abs, tag = 'smem constant byte address 0x4 - core index']
  #allocation1 [shape = 'u32[72,128]{1,0:T(1,128)}', space=vmem, size = 0x9000, scoped, tag = 'internal scratch']
  %s0 = inlined_call_operand.hbm [shape: f32[2,600], index: 0, kind: input, shape index: {}]
  %s1 = inlined_call_operand.hbm [shape: bf16[600,256], index: 1, kind: input, shape index: {}]
  %s2 = inlined_call_operand.hbm [shape: f32[1,256], index: 2, kind: input, shape index: {}]
  %s3 = inlined_call_operand.hbm [shape: bf16[256,128], index: 3, kind: input, shape index: {}]
  %s4 = inlined_call_operand.vmem [shape: f32[1,128], index: 4, kind: input, shape index: {}]
  %s5 = inlined_call_operand.hbm [shape: bf16[128,128], index: 5, kind: input, shape index: {}]
  %s6 = inlined_call_operand.vmem [shape: f32[1,128], index: 6, kind: input, shape index: {}]
  %s7 = inlined_call_operand.vmem [shape: f32[2], index: 7, kind: input, shape index: {}]
  %s8 = inlined_call_operand.hbm [shape: bf16[2,128], index: 8, kind: output, shape index: {}]
  %s9 = sld [smem:[#allocation0]]
  $region66: #{tpu_custom_call.1} parent=0
    _
  %s11 = ssub.s32 1, %s9
  %s12 = scalar_select 0, %s11, %s9
  $region1: #{tpu_custom_call.1} parent=0
    #allocation2 [shape = 'u8[5120]{0}', space=vmem, size = 0x1400, scoped, tag = 'input window, operand 0, single buffered']
    #allocation3 [shape = 's32[1]{0}', space=sflag, size = 0x4, scoped, tag = 'scoped memory for tpu_custom_call.1']
    #allocation4 [shape = 's32[1]{0}', space=sflag, size = 0x4, scoped, tag = 'scoped memory for tpu_custom_call.1']
    #allocation5 [shape = 's32[1]{0}', space=sflag, size = 0x4, scoped, tag = 'scoped memory for tpu_custom_call.1']
    #allocation6 [shape = 'u8[307200]{0}', space=vmem, size = 0x4b000, scoped, tag = 'input window, operand 1, single buffered']
    #allocation7 [shape = 's32[1]{0}', space=sflag, size = 0x4, scoped, tag = 'scoped memory for tpu_custom_call.1']
    #allocation8 [shape = 'u8[1024]{0}', space=vmem, size = 0x400, scoped, tag = 'input window, operand 2, single buffered']
    #allocation9 [shape = 'u8[65536]{0}', space=vmem, size = 0x10000, scoped, tag = 'input window, operand 3, single buffered']
    #allocation10 [shape = 's32[1]{0}', space=sflag, size = 0x4, scoped, tag = 'scoped memory for tpu_custom_call.1']
    #allocation11 [shape = 'u8[32768]{0}', space=vmem, size = 0x8000, scoped, tag = 'input window, operand 5, single buffered']
    #allocation12 [shape = 'u8[512]{0}', space=smem, size = 0x200, scoped, tag = 'input window, operand 7, single buffered']
    #allocation13 [shape = 'u8[512]{0}', space=vmem, size = 0x400, scoped, tag = 'output window, operand 0, single buffered']
    %13 = vsyncpa [#allocation3], 0
    %14 = vsyncpa [#allocation7], 0
    %15 = vsyncpa [#allocation10], 0
    %16 = vsyncpa [#allocation5], 0
    %17 = vsyncpa [#allocation4], 0
    // Predicated region
    $region2: #{tpu_custom_call.1} parent=1 // pred_check
      _
    $region3: #{tpu_custom_call.1} parent=1 // pred_check_branch
      %19 = sbr.rel (0) target = $region5
    $region4: #{tpu_custom_call.1} parent=1 // pred_region
      %21 = vsyncadd [#allocation3], 0
      %s23 = sshll.u32 %s0, 4
      %s24 = int_to_ptr.hbm [resolvable:$true] %s23
      %s25 = sshll.u32 [#allocation2], 4
      %s26 = int_to_ptr.vmem [resolvable:$true] %s25
      %28 = dma.hbm_to_vmem [thread:$0]  %s24, 160, %s26, [#allocation3]
    $region5: #{tpu_custom_call.1} parent=1 // pred_fallthru
      _
    // Predicated region
    $region6: #{tpu_custom_call.1} parent=1 // pred_check
      _
    $region7: #{tpu_custom_call.1} parent=1 // pred_check_branch
      %30 = sbr.rel (0) target = $region9
    $region8: #{tpu_custom_call.1} parent=1 // pred_region
      %32 = vsyncadd [#allocation7], 0
      %s33 = sshll.u32 %s1, 4
      %s34 = int_to_ptr.hbm [resolvable:$true] %s33
      %s35 = sshll.u32 [#allocation6], 4
      %s36 = int_to_ptr.vmem [resolvable:$true] %s35
      %41 = dma.hbm_to_vmem [thread:$0]  %s34, 9600, %s36, [#allocation7], 128, 128, 8
    $region9: #{tpu_custom_call.1} parent=1 // pred_fallthru
      _
    // Predicated region
    $region10: #{tpu_custom_call.1} parent=1 // pred_check
      _
    $region11: #{tpu_custom_call.1} parent=1 // pred_check_branch
      %43 = sbr.rel (0) target = $region13
    $region12: #{tpu_custom_call.1} parent=1 // pred_region
      %45 = vsyncadd [#allocation7], 0
      %s47 = sshll.u32 %s2, 4
      %s48 = int_to_ptr.hbm [resolvable:$true] %s47
      %s49 = sshll.u32 [#allocation8], 4
      %s50 = int_to_ptr.vmem [resolvable:$true] %s49
      %52 = dma.hbm_to_vmem [thread:$0]  %s48, 32, %s50, [#allocation7]
    $region13: #{tpu_custom_call.1} parent=1 // pred_fallthru
      _
    // Predicated region
    $region14: #{tpu_custom_call.1} parent=1 // pred_check
      _
    $region15: #{tpu_custom_call.1} parent=1 // pred_check_branch
      %54 = sbr.rel (0) target = $region17
    $region16: #{tpu_custom_call.1} parent=1 // pred_region
      %56 = vsyncadd [#allocation10], 0
      %s57 = sshll.u32 %s3, 4
      %s58 = int_to_ptr.hbm [resolvable:$true] %s57
      %s59 = sshll.u32 [#allocation9], 4
      %s60 = int_to_ptr.vmem [resolvable:$true] %s59
      %65 = dma.hbm_to_vmem [thread:$0]  %s58, 2048, %s60, [#allocation10], 64, 64, 4
    $region17: #{tpu_custom_call.1} parent=1 // pred_fallthru
      _
    // Predicated region
    $region18: #{tpu_custom_call.1} parent=1 // pred_check
      _
    $region19: #{tpu_custom_call.1} parent=1 // pred_check_branch
      %67 = sbr.rel (0) target = $region21
    $region20: #{tpu_custom_call.1} parent=1 // pred_region
      _
    $region21: #{tpu_custom_call.1} parent=1 // pred_fallthru
      _
    // Predicated region
    $region22: #{tpu_custom_call.1} parent=1 // pred_check
      _
    $region23: #{tpu_custom_call.1} parent=1 // pred_check_branch
      %69 = sbr.rel (0) target = $region25
    $region24: #{tpu_custom_call.1} parent=1 // pred_region
      %71 = vsyncadd [#allocation10], 0
      %s72 = sshll.u32 %s5, 4
      %s73 = int_to_ptr.hbm [resolvable:$true] %s72
      %s74 = sshll.u32 [#allocation11], 4
      %s75 = int_to_ptr.vmem [resolvable:$true] %s74
      %80 = dma.hbm_to_vmem [thread:$0]  %s73, 1024, %s75, [#allocation10], 64, 64, 4
    $region25: #{tpu_custom_call.1} parent=1 // pred_fallthru
      _
    // Predicated region
    $region26: #{tpu_custom_call.1} parent=1 // pred_check
      _
    $region27: #{tpu_custom_call.1} parent=1 // pred_check_branch
      %82 = sbr.rel (0) target = $region29
    $region28: #{tpu_custom_call.1} parent=1 // pred_region
      _
    $region29: #{tpu_custom_call.1} parent=1 // pred_fallthru
      _
    // Predicated region
    $region30: #{tpu_custom_call.1} parent=1 // pred_check
      _
    $region31: #{tpu_custom_call.1} parent=1 // pred_check_branch
      %84 = sbr.rel (0) target = $region33
    $region32: #{tpu_custom_call.1} parent=1 // pred_region
      %86 = vsyncadd [#allocation5], 0
      %s88 = sshll.u32 %s7, 4
      %s89 = int_to_ptr.vmem [resolvable:$true] %s88
      %91 = dma.vmem_to_smem %s89, 16, [#allocation12], [#allocation5]
    $region33: #{tpu_custom_call.1} parent=1 // pred_fallthru
      _
    // Predicated region
    $region34: #{tpu_custom_call.1} parent=1 // pred_check
      _
    $region35: #{tpu_custom_call.1} parent=1 // pred_check_branch
      %93 = sbr.rel (0) target = $region37
    $region36: #{tpu_custom_call.1} parent=1 // pred_region
      %95 = dma.done [#allocation3], 160
    $region37: #{tpu_custom_call.1} parent=1 // pred_fallthru
      _
    // Predicated region
    $region38: #{tpu_custom_call.1} parent=1 // pred_check
      _
    $region39: #{tpu_custom_call.1} parent=1 // pred_check_branch
      %97 = sbr.rel (0) target = $region41
    $region40: #{tpu_custom_call.1} parent=1 // pred_region
      %99 = dma.done [#allocation7], 9600
    $region41: #{tpu_custom_call.1} parent=1 // pred_fallthru
      _
    // Predicated region
    $region42: #{tpu_custom_call.1} parent=1 // pred_check
      _
    $region43: #{tpu_custom_call.1} parent=1 // pred_check_branch
      %101 = sbr.rel (0) target = $region45
    $region44: #{tpu_custom_call.1} parent=1 // pred_region
      %103 = dma.done [#allocation7], 32
    $region45: #{tpu_custom_call.1} parent=1 // pred_fallthru
      _
    // Predicated region
    $region46: #{tpu_custom_call.1} parent=1 // pred_check
      _
    $region47: #{tpu_custom_call.1} parent=1 // pred_check_branch
      %105 = sbr.rel (0) target = $region49
    $region48: #{tpu_custom_call.1} parent=1 // pred_region
      %107 = dma.done [#allocation10], 2048
    $region49: #{tpu_custom_call.1} parent=1 // pred_fallthru
      _
    // Predicated region
    $region50: #{tpu_custom_call.1} parent=1 // pred_check
      _
    $region51: #{tpu_custom_call.1} parent=1 // pred_check_branch
      %109 = sbr.rel (0) target = $region53
    $region52: #{tpu_custom_call.1} parent=1 // pred_region
      %111 = dma.done [#allocation10], 1024
    $region53: #{tpu_custom_call.1} parent=1 // pred_fallthru
      _
    // Predicated region
    $region54: #{tpu_custom_call.1} parent=1 // pred_check
      _
    $region55: #{tpu_custom_call.1} parent=1 // pred_check_branch
      %113 = sbr.rel (0) target = $region57
    $region56: #{tpu_custom_call.1} parent=1 // pred_region
      %115 = dma.done [#allocation5], 16
    $region57: #{tpu_custom_call.1} parent=1 // pred_fallthru
      _
    %116 = sfence
    %v118 = vld [vmem:[#allocation2] sm:$0xff]
    %v119 = vld [vmem:[#allocation2 + $0x8] sm:$0x3]
    %122 = vst [vmem:[#allocation1] ss:$4 sm:$0xff] %v118
    %s123 = scalar_lea.vmem [#allocation1], 32
    %124 = vst [vmem:[%s123] ss:$4 sm:$0xff] %v119
    %v125 = vld.sshfl [vmem:[#allocation1] sm:$0xff pattern:$0x73625140]
    %v126 = vld.sshfl [vmem:[#allocation1 + $0x8] sm:$0xff pattern:$0x73625140]
    %v127 = vld.sshfl [vmem:[#allocation1 + $0x10] sm:$0xff pattern:$0x73625140]
    %v128 = vld.sshfl [vmem:[#allocation1 + $0x18] sm:$0xff pattern:$0x73625140]
    %v129 = vld.sshfl [vmem:[#allocation1 + $0x20] sm:$0xff pattern:$0x73625140]
    %v135 = vpack.c.bf16 %v125, %v125
    %v136 = vpack.c.bf16 %v126, %v126
    %v137 = vpack.c.bf16 %v127, %v127
    %v138 = vpack.c.bf16 %v128, %v128
    %v139 = vpack.c.bf16 %v129, %v129
    %v140 = vld [vmem:[#allocation6] sm:$0xff]
    %v141 = vld [vmem:[#allocation6 + $0x8] sm:$0xff]
    %v142 = vld [vmem:[#allocation6 + $0x10] sm:$0xff]
    %v143 = vld [vmem:[#allocation6 + $0x18] sm:$0xff]
    %v144 = vld [vmem:[#allocation6 + $0x20] sm:$0xff]
    %v145 = vld [vmem:[#allocation6 + $0x28] sm:$0xff]
    %v146 = vld [vmem:[#allocation6 + $0x30] sm:$0xff]
    %v147 = vld [vmem:[#allocation6 + $0x38] sm:$0xff]
    %v148 = vld [vmem:[#allocation6 + $0x40] sm:$0xff]
    %v149 = vld [vmem:[#allocation6 + $0x48] sm:$0xff]
    %v150 = vld [vmem:[#allocation6 + $0x50] sm:$0xff]
    %v151 = vld [vmem:[#allocation6 + $0x58] sm:$0xff]
    %v152 = vld [vmem:[#allocation6 + $0x60] sm:$0xff]
    %v153 = vld [vmem:[#allocation6 + $0x68] sm:$0xff]
    %v154 = vld [vmem:[#allocation6 + $0x70] sm:$0xff]
    %v155 = vld [vmem:[#allocation6 + $0x78] sm:$0xff]
    %v156 = vld [vmem:[#allocation6 + $0x80] sm:$0xff]
    %v157 = vld [vmem:[#allocation6 + $0x88] sm:$0xff]
    %v158 = vld [vmem:[#allocation6 + $0x90] sm:$0xff]
    %v159 = vld [vmem:[#allocation6 + $0x98] sm:$0xff]
    %v160 = vld [vmem:[#allocation6 + $0xa0] sm:$0xff]
    %v161 = vld [vmem:[#allocation6 + $0xa8] sm:$0xff]
    %v162 = vld [vmem:[#allocation6 + $0xb0] sm:$0xff]
    %v163 = vld [vmem:[#allocation6 + $0xb8] sm:$0xff]
    %v164 = vld [vmem:[#allocation6 + $0xc0] sm:$0xff]
    %v165 = vld [vmem:[#allocation6 + $0xc8] sm:$0xff]
    %v166 = vld [vmem:[#allocation6 + $0xd0] sm:$0xff]
    %v167 = vld [vmem:[#allocation6 + $0xd8] sm:$0xff]
    %v168 = vld [vmem:[#allocation6 + $0xe0] sm:$0xff]
    %v169 = vld [vmem:[#allocation6 + $0xe8] sm:$0xff]
    %v170 = vld [vmem:[#allocation6 + $0xf0] sm:$0xff]
    %v171 = vld [vmem:[#allocation6 + $0xf8] sm:$0xff]
    %v172 = vld [vmem:[#allocation6 + $0x100] sm:$0xff]
    %v173 = vld [vmem:[#allocation6 + $0x108] sm:$0xff]
    %v174 = vld [vmem:[#allocation6 + $0x110] sm:$0xff]
    %v175 = vld [vmem:[#allocation6 + $0x118] sm:$0xff]
    %v176 = vld [vmem:[#allocation6 + $0x120] sm:$0xff]
    %v177 = vld [vmem:[#allocation6 + $0x128] sm:$0xff]
    %v178 = vld [vmem:[#allocation6 + $0x130] sm:$0xff]
    %v179 = vld [vmem:[#allocation6 + $0x138] sm:$0xff]
    %v180 = vld [vmem:[#allocation6 + $0x140] sm:$0xff]
    %v181 = vld [vmem:[#allocation6 + $0x148] sm:$0xff]
    %v182 = vld [vmem:[#allocation6 + $0x150] sm:$0xff]
    %v183 = vld [vmem:[#allocation6 + $0x158] sm:$0xff]
    %v184 = vld [vmem:[#allocation6 + $0x160] sm:$0xff]
    %v185 = vld [vmem:[#allocation6 + $0x168] sm:$0xff]
    %v186 = vld [vmem:[#allocation6 + $0x170] sm:$0xff]
    %v187 = vld [vmem:[#allocation6 + $0x178] sm:$0xff]
    %v188 = vld [vmem:[#allocation6 + $0x180] sm:$0xff]
    %v189 = vld [vmem:[#allocation6 + $0x188] sm:$0xff]
    %v190 = vld [vmem:[#allocation6 + $0x190] sm:$0xff]
    %v191 = vld [vmem:[#allocation6 + $0x198] sm:$0xff]
    %v192 = vld [vmem:[#allocation6 + $0x1a0] sm:$0xff]
    %v193 = vld [vmem:[#allocation6 + $0x1a8] sm:$0xff]
    %v194 = vld [vmem:[#allocation6 + $0x1b0] sm:$0xff]
    %v195 = vld [vmem:[#allocation6 + $0x1b8] sm:$0xff]
    %v196 = vld [vmem:[#allocation6 + $0x1c0] sm:$0xff]
    %v197 = vld [vmem:[#allocation6 + $0x1c8] sm:$0xff]
    %v198 = vld [vmem:[#allocation6 + $0x1d0] sm:$0xff]
    %v199 = vld [vmem:[#allocation6 + $0x1d8] sm:$0xff]
    %v200 = vld [vmem:[#allocation6 + $0x1e0] sm:$0xff]
    %v201 = vld [vmem:[#allocation6 + $0x1e8] sm:$0xff]
    %v202 = vld [vmem:[#allocation6 + $0x1f0] sm:$0xff]
    %v203 = vld [vmem:[#allocation6 + $0x1f8] sm:$0xff]
    %v204 = vld [vmem:[#allocation6 + $0x200] sm:$0xff]
    %v205 = vld [vmem:[#allocation6 + $0x208] sm:$0xff]
    %v206 = vld [vmem:[#allocation6 + $0x210] sm:$0xff]
    %v207 = vld [vmem:[#allocation6 + $0x218] sm:$0xff]
    %v208 = vld [vmem:[#allocation6 + $0x220] sm:$0xff]
    %v209 = vld [vmem:[#allocation6 + $0x228] sm:$0xff]
    %v210 = vld [vmem:[#allocation6 + $0x230] sm:$0xff]
    %v211 = vld [vmem:[#allocation6 + $0x238] sm:$0xff]
    %v212 = vld [vmem:[#allocation6 + $0x240] sm:$0xff]
    %v213 = vld [vmem:[#allocation6 + $0x248] sm:$0xff]
    %v214 = vld [vmem:[#allocation6 + $0x250] sm:$0xff]
    %v215 = vld [vmem:[#allocation8] sm:$0x3]
    %v217 = vperm.slane %v215, 0
    %v218 = vperm.slane %v215, 1
    %v296 = vunpack.c.l.b16 %v140
    %v297 = vunpack.c.h.b16 %v140
    %v298 = vunpack.c.l.b16 %v141
    %v299 = vunpack.c.h.b16 %v141
    %v300 = vunpack.c.l.b16 %v142
    %v301 = vunpack.c.h.b16 %v142
    %v302 = vunpack.c.l.b16 %v143
    %v303 = vunpack.c.h.b16 %v143
    %v304 = vunpack.c.l.b16 %v144
    %v305 = vunpack.c.h.b16 %v144
    %v306 = vunpack.c.l.b16 %v145
    %v307 = vunpack.c.h.b16 %v145
    %v308 = vunpack.c.l.b16 %v146
    %v309 = vunpack.c.h.b16 %v146
    %v310 = vunpack.c.l.b16 %v147
    %v311 = vunpack.c.h.b16 %v147
    %v312 = vunpack.c.l.b16 %v148
    %v313 = vunpack.c.h.b16 %v148
    %v314 = vunpack.c.l.b16 %v149
    %v315 = vunpack.c.h.b16 %v149
    %v316 = vunpack.c.l.b16 %v150
    %v317 = vunpack.c.h.b16 %v150
    %v318 = vunpack.c.l.b16 %v151
    %v319 = vunpack.c.h.b16 %v151
    %v320 = vunpack.c.l.b16 %v152
    %v321 = vunpack.c.h.b16 %v152
    %v322 = vunpack.c.l.b16 %v153
    %v323 = vunpack.c.h.b16 %v153
    %v324 = vunpack.c.l.b16 %v154
    %v325 = vunpack.c.h.b16 %v154
    %v326 = vunpack.c.l.b16 %v155
    %v327 = vunpack.c.h.b16 %v155
    %v328 = vunpack.c.l.b16 %v156
    %v329 = vunpack.c.h.b16 %v156
    %v330 = vunpack.c.l.b16 %v157
    %v331 = vunpack.c.h.b16 %v157
    %v332 = vunpack.c.l.b16 %v158
    %v333 = vunpack.c.h.b16 %v158
    %v334 = vunpack.c.l.b16 %v159
    %v335 = vunpack.c.h.b16 %v159
    %v336 = vunpack.c.l.b16 %v160
    %v337 = vunpack.c.h.b16 %v160
    %v338 = vunpack.c.l.b16 %v161
    %v339 = vunpack.c.h.b16 %v161
    %v340 = vunpack.c.l.b16 %v162
    %v341 = vunpack.c.h.b16 %v162
    %v342 = vunpack.c.l.b16 %v163
    %v343 = vunpack.c.h.b16 %v163
    %v344 = vunpack.c.l.b16 %v164
    %v345 = vunpack.c.h.b16 %v164
    %v346 = vunpack.c.l.b16 %v165
    %v347 = vunpack.c.h.b16 %v165
    %v348 = vunpack.c.l.b16 %v166
    %v349 = vunpack.c.h.b16 %v166
    %v350 = vunpack.c.l.b16 %v167
    %v351 = vunpack.c.h.b16 %v167
    %v352 = vunpack.c.l.b16 %v168
    %v353 = vunpack.c.h.b16 %v168
    %v354 = vunpack.c.l.b16 %v169
    %v355 = vunpack.c.h.b16 %v169
    %v356 = vunpack.c.l.b16 %v170
    %v357 = vunpack.c.h.b16 %v170
    %v358 = vunpack.c.l.b16 %v171
    %v359 = vunpack.c.h.b16 %v171
    %v360 = vunpack.c.l.b16 %v172
    %v361 = vunpack.c.h.b16 %v172
    %v362 = vunpack.c.l.b16 %v173
    %v363 = vunpack.c.h.b16 %v173
    %v364 = vunpack.c.l.b16 %v174
    %v365 = vunpack.c.h.b16 %v174
    %v366 = vunpack.c.l.b16 %v175
    %v367 = vunpack.c.h.b16 %v175
    %v368 = vunpack.c.l.b16 %v176
    %v369 = vunpack.c.h.b16 %v176
    %v370 = vunpack.c.l.b16 %v177
    %v371 = vunpack.c.h.b16 %v177
    %v372 = vunpack.c.l.b16 %v178
    %v373 = vunpack.c.h.b16 %v178
    %v374 = vunpack.c.l.b16 %v179
    %v375 = vunpack.c.h.b16 %v179
    %v376 = vunpack.c.l.b16 %v180
    %v377 = vunpack.c.h.b16 %v180
    %v378 = vunpack.c.l.b16 %v181
    %v379 = vunpack.c.h.b16 %v181
    %v380 = vunpack.c.l.b16 %v182
    %v381 = vunpack.c.h.b16 %v182
    %v382 = vunpack.c.l.b16 %v183
    %v383 = vunpack.c.h.b16 %v183
    %v384 = vunpack.c.l.b16 %v184
    %v385 = vunpack.c.h.b16 %v184
    %v386 = vunpack.c.l.b16 %v185
    %v387 = vunpack.c.h.b16 %v185
    %v388 = vunpack.c.l.b16 %v186
    %v389 = vunpack.c.h.b16 %v186
    %v390 = vunpack.c.l.b16 %v187
    %v391 = vunpack.c.h.b16 %v187
    %v392 = vunpack.c.l.b16 %v188
    %v393 = vunpack.c.h.b16 %v188
    %v394 = vunpack.c.l.b16 %v189
    %v395 = vunpack.c.h.b16 %v189
    %v396 = vunpack.c.l.b16 %v190
    %v397 = vunpack.c.h.b16 %v190
    %v398 = vunpack.c.l.b16 %v191
    %v399 = vunpack.c.h.b16 %v191
    %v400 = vunpack.c.l.b16 %v192
    %v401 = vunpack.c.h.b16 %v192
    %v402 = vunpack.c.l.b16 %v193
    %v403 = vunpack.c.h.b16 %v193
    %v404 = vunpack.c.l.b16 %v194
    %v405 = vunpack.c.h.b16 %v194
    %v406 = vunpack.c.l.b16 %v195
    %v407 = vunpack.c.h.b16 %v195
    %v408 = vunpack.c.l.b16 %v196
    %v409 = vunpack.c.h.b16 %v196
    %v410 = vunpack.c.l.b16 %v197
    %v411 = vunpack.c.h.b16 %v197
    %v412 = vunpack.c.l.b16 %v198
    %v413 = vunpack.c.h.b16 %v198
    %v414 = vunpack.c.l.b16 %v199
    %v415 = vunpack.c.h.b16 %v199
    %v416 = vunpack.c.l.b16 %v200
    %v417 = vunpack.c.h.b16 %v200
    %v418 = vunpack.c.l.b16 %v201
    %v419 = vunpack.c.h.b16 %v201
    %v420 = vunpack.c.l.b16 %v202
    %v421 = vunpack.c.h.b16 %v202
    %v422 = vunpack.c.l.b16 %v203
    %v423 = vunpack.c.h.b16 %v203
    %v424 = vunpack.c.l.b16 %v204
    %v425 = vunpack.c.h.b16 %v204
    %v426 = vunpack.c.l.b16 %v205
    %v427 = vunpack.c.h.b16 %v205
    %v428 = vunpack.c.l.b16 %v206
    %v429 = vunpack.c.h.b16 %v206
    %v430 = vunpack.c.l.b16 %v207
    %v431 = vunpack.c.h.b16 %v207
    %v432 = vunpack.c.l.b16 %v208
    %v433 = vunpack.c.h.b16 %v208
    %v434 = vunpack.c.l.b16 %v209
    %v435 = vunpack.c.h.b16 %v209
    %v436 = vunpack.c.l.b16 %v210
    %v437 = vunpack.c.h.b16 %v210
    %v438 = vunpack.c.l.b16 %v211
    %v439 = vunpack.c.h.b16 %v211
    %v440 = vunpack.c.l.b16 %v212
    %v441 = vunpack.c.h.b16 %v212
    %v442 = vunpack.c.l.b16 %v213
    %v443 = vunpack.c.h.b16 %v213
    %v444 = vunpack.c.l.b16 %v214
    %v445 = vunpack.c.h.b16 %v214
    %v446 = vpack.c.b16 %v298, %v296
    %v447 = vpack.c.b16 %v299, %v297
    %v448 = vpack.c.b16 %v302, %v300
    %v449 = vpack.c.b16 %v303, %v301
    %v450 = vpack.c.b16 %v306, %v304
    %v451 = vpack.c.b16 %v307, %v305
    %v452 = vpack.c.b16 %v310, %v308
    %v453 = vpack.c.b16 %v311, %v309
    %v454 = vpack.c.b16 %v314, %v312
    %v455 = vpack.c.b16 %v315, %v313
    %v456 = vpack.c.b16 %v318, %v316
    %v457 = vpack.c.b16 %v319, %v317
    %v458 = vpack.c.b16 %v322, %v320
    %v459 = vpack.c.b16 %v323, %v321
    %v460 = vpack.c.b16 %v326, %v324
    %v461 = vpack.c.b16 %v327, %v325
    %v462 = vpack.c.b16 %v330, %v328
    %v463 = vpack.c.b16 %v331, %v329
    %v464 = vpack.c.b16 %v334, %v332
    %v465 = vpack.c.b16 %v335, %v333
    %v466 = vpack.c.b16 %v338, %v336
    %v467 = vpack.c.b16 %v339, %v337
    %v468 = vpack.c.b16 %v342, %v340
    %v469 = vpack.c.b16 %v343, %v341
    %v470 = vpack.c.b16 %v346, %v344
    %v471 = vpack.c.b16 %v347, %v345
    %v472 = vpack.c.b16 %v350, %v348
    %v473 = vpack.c.b16 %v351, %v349
    %v474 = vpack.c.b16 %v354, %v352
    %v475 = vpack.c.b16 %v355, %v353
    %v476 = vpack.c.b16 %v358, %v356
    %v477 = vpack.c.b16 %v359, %v357
    %v478 = vpack.c.b16 %v362, %v360
    %v479 = vpack.c.b16 %v363, %v361
    %v480 = vpack.c.b16 %v366, %v364
    %v481 = vpack.c.b16 %v367, %v365
    %v482 = vpack.c.b16 %v370, %v368
    %v483 = vpack.c.b16 %v371, %v369
    %v484 = vpack.c.b16 %v374, %v372
    %v485 = vpack.c.b16 %v375, %v373
    %v486 = vpack.c.b16 %v378, %v376
    %v487 = vpack.c.b16 %v379, %v377
    %v488 = vpack.c.b16 %v382, %v380
    %v489 = vpack.c.b16 %v383, %v381
    %v490 = vpack.c.b16 %v386, %v384
    %v491 = vpack.c.b16 %v387, %v385
    %v492 = vpack.c.b16 %v390, %v388
    %v493 = vpack.c.b16 %v391, %v389
    %v494 = vpack.c.b16 %v394, %v392
    %v495 = vpack.c.b16 %v395, %v393
    %v496 = vpack.c.b16 %v398, %v396
    %v497 = vpack.c.b16 %v399, %v397
    %v498 = vpack.c.b16 %v402, %v400
    %v499 = vpack.c.b16 %v403, %v401
    %v500 = vpack.c.b16 %v406, %v404
    %v501 = vpack.c.b16 %v407, %v405
    %v502 = vpack.c.b16 %v410, %v408
    %v503 = vpack.c.b16 %v411, %v409
    %v504 = vpack.c.b16 %v414, %v412
    %v505 = vpack.c.b16 %v415, %v413
    %v506 = vpack.c.b16 %v418, %v416
    %v507 = vpack.c.b16 %v419, %v417
    %v508 = vpack.c.b16 %v422, %v420
    %v509 = vpack.c.b16 %v423, %v421
    %v510 = vpack.c.b16 %v426, %v424
    %v511 = vpack.c.b16 %v427, %v425
    %v512 = vpack.c.b16 %v430, %v428
    %v513 = vpack.c.b16 %v431, %v429
    %v514 = vpack.c.b16 %v434, %v432
    %v515 = vpack.c.b16 %v435, %v433
    %v516 = vpack.c.b16 %v438, %v436
    %v517 = vpack.c.b16 %v439, %v437
    %v518 = vpack.c.b16 %v442, %v440
    %v519 = vpack.c.b16 %v443, %v441
    %v520 = vpack.c.b16 %v444, %v444
    %v521 = vpack.c.b16 %v445, %v445
    %vm596 = vcmask 719872
    %v598 = vsel %vm596, %v139, 0
    %vm600 = vcmask 1043456
    %v602 = vsel %vm600, %v520, 0
    %v605 = vsel %vm600, %v521, 0
    %607 = vmatpush.bf16.msra.mxu0 %v460
    %608 = vmatpush.bf16.msra.mxu0 %v458
    %609 = vmatpush.bf16.msra.mxu0 %v456
    %610 = vmatpush.bf16.msra.mxu0 %v454
    %611 = vmatpush.bf16.msra.mxu0 %v452
    %612 = vmatpush.bf16.msra.mxu0 %v450
    %613 = vmatpush.bf16.msra.mxu0 %v448
    %614 = vmatpush.bf16.msra.mxu0 %v446
    %615 = vmatmul.bf16.gmra.mxu0 %v135
    %v616 = vpop.f32.mrf.mxu0
    %v617 = vadd.f32 %v217, %v616
    %v618 = vpop.f32.mrf.mxu0
    %619 = vdwg.mxu0
    %620 = vmatpush.bf16.msra.mxu0 %v476
    %621 = vmatpush.bf16.msra.mxu0 %v474
    %622 = vmatpush.bf16.msra.mxu0 %v472
    %623 = vmatpush.bf16.msra.mxu0 %v470
    %624 = vmatpush.bf16.msra.mxu0 %v468
    %625 = vmatpush.bf16.msra.mxu0 %v466
    %626 = vmatpush.bf16.msra.mxu0 %v464
    %627 = vmatpush.bf16.msra.mxu0 %v462
    %628 = vmatmul.bf16.gmra.mxu0 %v136
    %v629 = vpop.f32.mrf.mxu0
    %v630 = vadd.f32 %v617, %v629
    %v631 = vpop.f32.mrf.mxu0
    %632 = vdwg.mxu0
    %633 = vmatpush.bf16.msra.mxu0 %v492
    %634 = vmatpush.bf16.msra.mxu0 %v490
    %635 = vmatpush.bf16.msra.mxu0 %v488
    %636 = vmatpush.bf16.msra.mxu0 %v486
    %637 = vmatpush.bf16.msra.mxu0 %v484
    %638 = vmatpush.bf16.msra.mxu0 %v482
    %639 = vmatpush.bf16.msra.mxu0 %v480
    %640 = vmatpush.bf16.msra.mxu0 %v478
    %641 = vmatmul.bf16.gmra.mxu0 %v137
    %v642 = vpop.f32.mrf.mxu0
    %v643 = vadd.f32 %v630, %v642
    %v644 = vpop.f32.mrf.mxu0
    %645 = vdwg.mxu0
    %646 = vmatpush.bf16.msra.mxu0 %v508
    %647 = vmatpush.bf16.msra.mxu0 %v506
    %648 = vmatpush.bf16.msra.mxu0 %v504
    %649 = vmatpush.bf16.msra.mxu0 %v502
    %650 = vmatpush.bf16.msra.mxu0 %v500
    %651 = vmatpush.bf16.msra.mxu0 %v498
    %652 = vmatpush.bf16.msra.mxu0 %v496
    %653 = vmatpush.bf16.msra.mxu0 %v494
    %654 = vmatmul.bf16.gmra.mxu0 %v138
    %v655 = vpop.f32.mrf.mxu0
    %v656 = vadd.f32 %v643, %v655
    %v657 = vpop.f32.mrf.mxu0
    %658 = vdwg.mxu0
    %659 = vmatpush.bf16.msra.mxu0 0
    %660 = vmatpush.bf16.msra.mxu0 0
    %661 = vmatpush.bf16.msra.mxu0 %v602
    %662 = vmatpush.bf16.msra.mxu0 %v518
    %663 = vmatpush.bf16.msra.mxu0 %v516
    %664 = vmatpush.bf16.msra.mxu0 %v514
    %665 = vmatpush.bf16.msra.mxu0 %v512
    %666 = vmatpush.bf16.msra.mxu0 %v510
    %667 = vmatmul.bf16.gmra.mxu0 %v598
    %v668 = vpop.f32.mrf.mxu0
    %v669 = vadd.f32 %v656, %v668
    %v670 = vpop.f32.mrf.mxu0
    %671 = vdwg.mxu0
    %672 = vmatpush.bf16.msra.mxu0 %v461
    %673 = vmatpush.bf16.msra.mxu0 %v459
    %674 = vmatpush.bf16.msra.mxu0 %v457
    %675 = vmatpush.bf16.msra.mxu0 %v455
    %676 = vmatpush.bf16.msra.mxu0 %v453
    %677 = vmatpush.bf16.msra.mxu0 %v451
    %678 = vmatpush.bf16.msra.mxu0 %v449
    %679 = vmatpush.bf16.msra.mxu0 %v447
    %680 = vmatmul.bf16.gmra.mxu0 %v135
    %v681 = vpop.f32.mrf.mxu0
    %v682 = vadd.f32 %v218, %v681
    %v683 = vpop.f32.mrf.mxu0
    %684 = vdwg.mxu0
    %685 = vmatpush.bf16.msra.mxu0 %v477
    %686 = vmatpush.bf16.msra.mxu0 %v475
    %687 = vmatpush.bf16.msra.mxu0 %v473
    %688 = vmatpush.bf16.msra.mxu0 %v471
    %689 = vmatpush.bf16.msra.mxu0 %v469
    %690 = vmatpush.bf16.msra.mxu0 %v467
    %691 = vmatpush.bf16.msra.mxu0 %v465
    %692 = vmatpush.bf16.msra.mxu0 %v463
    %693 = vmatmul.bf16.gmra.mxu0 %v136
    %v694 = vpop.f32.mrf.mxu0
    %v695 = vadd.f32 %v682, %v694
    %v696 = vpop.f32.mrf.mxu0
    %697 = vdwg.mxu0
    %698 = vmatpush.bf16.msra.mxu0 %v493
    %699 = vmatpush.bf16.msra.mxu0 %v491
    %700 = vmatpush.bf16.msra.mxu0 %v489
    %701 = vmatpush.bf16.msra.mxu0 %v487
    %702 = vmatpush.bf16.msra.mxu0 %v485
    %703 = vmatpush.bf16.msra.mxu0 %v483
    %704 = vmatpush.bf16.msra.mxu0 %v481
    %705 = vmatpush.bf16.msra.mxu0 %v479
    %706 = vmatmul.bf16.gmra.mxu0 %v137
    %v707 = vpop.f32.mrf.mxu0
    %v708 = vadd.f32 %v695, %v707
    %v709 = vpop.f32.mrf.mxu0
    %710 = vdwg.mxu0
    %711 = vmatpush.bf16.msra.mxu0 %v509
    %712 = vmatpush.bf16.msra.mxu0 %v507
    %713 = vmatpush.bf16.msra.mxu0 %v505
    %714 = vmatpush.bf16.msra.mxu0 %v503
    %715 = vmatpush.bf16.msra.mxu0 %v501
    %716 = vmatpush.bf16.msra.mxu0 %v499
    %717 = vmatpush.bf16.msra.mxu0 %v497
    %718 = vmatpush.bf16.msra.mxu0 %v495
    %719 = vmatmul.bf16.gmra.mxu0 %v138
    %v720 = vpop.f32.mrf.mxu0
    %v721 = vadd.f32 %v708, %v720
    %v722 = vpop.f32.mrf.mxu0
    %723 = vdwg.mxu0
    %724 = vmatpush.bf16.msra.mxu0 0
    %725 = vmatpush.bf16.msra.mxu0 0
    %726 = vmatpush.bf16.msra.mxu0 %v605
    %727 = vmatpush.bf16.msra.mxu0 %v519
    %728 = vmatpush.bf16.msra.mxu0 %v517
    %729 = vmatpush.bf16.msra.mxu0 %v515
    %730 = vmatpush.bf16.msra.mxu0 %v513
    %731 = vmatpush.bf16.msra.mxu0 %v511
    %732 = vmatmul.bf16.gmra.mxu0 %v598
    %v733 = vpop.f32.mrf.mxu0
    %v734 = vadd.f32 %v721, %v733
    %v735 = vpop.f32.mrf.mxu0
    %736 = vdwg.mxu0
    %s737 = sld [smem:[#allocation12]]
    %vm738 = vcmp.gt.f32.partialorder %v669, 0.0
    %vm739 = vcmp.gt.f32.partialorder %v734, 0.0
    %v740 = vstv %s737
    %v741 = vmul.f32 %v740, %v669
    %v742 = vmul.f32 %v740, %v734
    %v743 = vsel %vm738, %v669, %v741
    %v744 = vsel %vm739, %v734, %v742
    %v745 = vpack.c.bf16 %v743, %v743
    %v746 = vpack.c.bf16 %v744, %v744
    %v747 = vld [vmem:[#allocation9] sm:$0xf]
    %v748 = vld [vmem:[#allocation9 + $0x4] sm:$0xf]
    %v749 = vld [vmem:[#allocation9 + $0x8] sm:$0xf]
    %v750 = vld [vmem:[#allocation9 + $0xc] sm:$0xf]
    %v751 = vld [vmem:[#allocation9 + $0x10] sm:$0xf]
    %v752 = vld [vmem:[#allocation9 + $0x14] sm:$0xf]
    %v753 = vld [vmem:[#allocation9 + $0x18] sm:$0xf]
    %v754 = vld [vmem:[#allocation9 + $0x1c] sm:$0xf]
    %v755 = vld [vmem:[#allocation9 + $0x20] sm:$0xf]
    %v756 = vld [vmem:[#allocation9 + $0x24] sm:$0xf]
    %v757 = vld [vmem:[#allocation9 + $0x28] sm:$0xf]
    %v758 = vld [vmem:[#allocation9 + $0x2c] sm:$0xf]
    %v759 = vld [vmem:[#allocation9 + $0x30] sm:$0xf]
    %v760 = vld [vmem:[#allocation9 + $0x34] sm:$0xf]
    %v761 = vld [vmem:[#allocation9 + $0x38] sm:$0xf]
    %v762 = vld [vmem:[#allocation9 + $0x3c] sm:$0xf]
    %v763 = vld [vmem:[#allocation9 + $0x40] sm:$0xf]
    %v764 = vld [vmem:[#allocation9 + $0x44] sm:$0xf]
    %v765 = vld [vmem:[#allocation9 + $0x48] sm:$0xf]
    %v766 = vld [vmem:[#allocation9 + $0x4c] sm:$0xf]
    %v767 = vld [vmem:[#allocation9 + $0x50] sm:$0xf]
    %v768 = vld [vmem:[#allocation9 + $0x54] sm:$0xf]
    %v769 = vld [vmem:[#allocation9 + $0x58] sm:$0xf]
    %v770 = vld [vmem:[#allocation9 + $0x5c] sm:$0xf]
    %v771 = vld [vmem:[#allocation9 + $0x60] sm:$0xf]
    %v772 = vld [vmem:[#allocation9 + $0x64] sm:$0xf]
    %v773 = vld [vmem:[#allocation9 + $0x68] sm:$0xf]
    %v774 = vld [vmem:[#allocation9 + $0x6c] sm:$0xf]
    %v775 = vld [vmem:[#allocation9 + $0x70] sm:$0xf]
    %v776 = vld [vmem:[#allocation9 + $0x74] sm:$0xf]
    %v777 = vld [vmem:[#allocation9 + $0x78] sm:$0xf]
    %v778 = vld [vmem:[#allocation9 + $0x7c] sm:$0xf]
    %v779 = vld [vmem:[%s4] sm:$0x1]
    %v781 = vperm.slane %v779, 0
    %v815 = vunpack.c.l.b16 %v747
    %v816 = vunpack.c.l.b16 %v748
    %v817 = vunpack.c.l.b16 %v749
    %v818 = vunpack.c.l.b16 %v750
    %v819 = vunpack.c.l.b16 %v751
    %v820 = vunpack.c.l.b16 %v752
    %v821 = vunpack.c.l.b16 %v753
    %v822 = vunpack.c.l.b16 %v754
    %v823 = vunpack.c.l.b16 %v755
    %v824 = vunpack.c.l.b16 %v756
    %v825 = vunpack.c.l.b16 %v757
    %v826 = vunpack.c.l.b16 %v758
    %v827 = vunpack.c.l.b16 %v759
    %v828 = vunpack.c.l.b16 %v760
    %v829 = vunpack.c.l.b16 %v761
    %v830 = vunpack.c.l.b16 %v762
    %v831 = vunpack.c.l.b16 %v763
    %v832 = vunpack.c.l.b16 %v764
    %v833 = vunpack.c.l.b16 %v765
    %v834 = vunpack.c.l.b16 %v766
    %v835 = vunpack.c.l.b16 %v767
    %v836 = vunpack.c.l.b16 %v768
    %v837 = vunpack.c.l.b16 %v769
    %v838 = vunpack.c.l.b16 %v770
    %v839 = vunpack.c.l.b16 %v771
    %v840 = vunpack.c.l.b16 %v772
    %v841 = vunpack.c.l.b16 %v773
    %v842 = vunpack.c.l.b16 %v774
    %v843 = vunpack.c.l.b16 %v775
    %v844 = vunpack.c.l.b16 %v776
    %v845 = vunpack.c.l.b16 %v777
    %v846 = vunpack.c.l.b16 %v778
    %v847 = vpack.c.b16 %v816, %v815
    %v848 = vpack.c.b16 %v818, %v817
    %v849 = vpack.c.b16 %v820, %v819
    %v850 = vpack.c.b16 %v822, %v821
    %v851 = vpack.c.b16 %v824, %v823
    %v852 = vpack.c.b16 %v826, %v825
    %v853 = vpack.c.b16 %v828, %v827
    %v854 = vpack.c.b16 %v830, %v829
    %v855 = vpack.c.b16 %v832, %v831
    %v856 = vpack.c.b16 %v834, %v833
    %v857 = vpack.c.b16 %v836, %v835
    %v858 = vpack.c.b16 %v838, %v837
    %v859 = vpack.c.b16 %v840, %v839
    %v860 = vpack.c.b16 %v842, %v841
    %v861 = vpack.c.b16 %v844, %v843
    %v862 = vpack.c.b16 %v846, %v845
    %879 = vmatpush.bf16.msra.mxu0 %v854
    %880 = vmatpush.bf16.msra.mxu0 %v853
    %881 = vmatpush.bf16.msra.mxu0 %v852
    %882 = vmatpush.bf16.msra.mxu0 %v851
    %883 = vmatpush.bf16.msra.mxu0 %v850
    %884 = vmatpush.bf16.msra.mxu0 %v849
    %885 = vmatpush.bf16.msra.mxu0 %v848
    %886 = vmatpush.bf16.msra.mxu0 %v847
    %887 = vmatmul.bf16.gmra.mxu0 %v745
    %v888 = vpop.f32.mrf.mxu0
    %v889 = vadd.f32 %v781, %v888
    %v890 = vpop.f32.mrf.mxu0
    %891 = vdwg.mxu0
    %892 = vmatpush.bf16.msra.mxu0 %v862
    %893 = vmatpush.bf16.msra.mxu0 %v861
    %894 = vmatpush.bf16.msra.mxu0 %v860
    %895 = vmatpush.bf16.msra.mxu0 %v859
    %896 = vmatpush.bf16.msra.mxu0 %v858
    %897 = vmatpush.bf16.msra.mxu0 %v857
    %898 = vmatpush.bf16.msra.mxu0 %v856
    %899 = vmatpush.bf16.msra.mxu0 %v855
    %900 = vmatmul.bf16.gmra.mxu0 %v746
    %v901 = vpop.f32.mrf.mxu0
    %v902 = vadd.f32 %v889, %v901
    %v903 = vpop.f32.mrf.mxu0
    %904 = vdwg.mxu0
    %s905 = sld [smem:[#allocation12 + $0x1]]
    %vm906 = vcmp.gt.f32.partialorder %v902, 0.0
    %v907 = vstv %s905
    %v908 = vmul.f32 %v907, %v902
    %v909 = vsel %vm906, %v902, %v908
    %v910 = vpack.c.bf16 %v909, %v909
    %v911 = vld [vmem:[#allocation11] sm:$0xf]
    %v912 = vld [vmem:[#allocation11 + $0x4] sm:$0xf]
    %v913 = vld [vmem:[#allocation11 + $0x8] sm:$0xf]
    %v914 = vld [vmem:[#allocation11 + $0xc] sm:$0xf]
    %v915 = vld [vmem:[#allocation11 + $0x10] sm:$0xf]
    %v916 = vld [vmem:[#allocation11 + $0x14] sm:$0xf]
    %v917 = vld [vmem:[#allocation11 + $0x18] sm:$0xf]
    %v918 = vld [vmem:[#allocation11 + $0x1c] sm:$0xf]
    %v919 = vld [vmem:[#allocation11 + $0x20] sm:$0xf]
    %v920 = vld [vmem:[#allocation11 + $0x24] sm:$0xf]
    %v921 = vld [vmem:[#allocation11 + $0x28] sm:$0xf]
    %v922 = vld [vmem:[#allocation11 + $0x2c] sm:$0xf]
    %v923 = vld [vmem:[#allocation11 + $0x30] sm:$0xf]
    %v924 = vld [vmem:[#allocation11 + $0x34] sm:$0xf]
    %v925 = vld [vmem:[#allocation11 + $0x38] sm:$0xf]
    %v926 = vld [vmem:[#allocation11 + $0x3c] sm:$0xf]
    %v927 = vld [vmem:[%s6] sm:$0x1]
    %v929 = vperm.slane %v927, 0
    %v947 = vunpack.c.l.b16 %v911
    %v948 = vunpack.c.l.b16 %v912
    %v949 = vunpack.c.l.b16 %v913
    %v950 = vunpack.c.l.b16 %v914
    %v951 = vunpack.c.l.b16 %v915
    %v952 = vunpack.c.l.b16 %v916
    %v953 = vunpack.c.l.b16 %v917
    %v954 = vunpack.c.l.b16 %v918
    %v955 = vunpack.c.l.b16 %v919
    %v956 = vunpack.c.l.b16 %v920
    %v957 = vunpack.c.l.b16 %v921
    %v958 = vunpack.c.l.b16 %v922
    %v959 = vunpack.c.l.b16 %v923
    %v960 = vunpack.c.l.b16 %v924
    %v961 = vunpack.c.l.b16 %v925
    %v962 = vunpack.c.l.b16 %v926
    %v963 = vpack.c.b16 %v948, %v947
    %v964 = vpack.c.b16 %v950, %v949
    %v965 = vpack.c.b16 %v952, %v951
    %v966 = vpack.c.b16 %v954, %v953
    %v967 = vpack.c.b16 %v956, %v955
    %v968 = vpack.c.b16 %v958, %v957
    %v969 = vpack.c.b16 %v960, %v959
    %v970 = vpack.c.b16 %v962, %v961
    %979 = vmatpush.bf16.msra.mxu0 %v970
    %980 = vmatpush.bf16.msra.mxu0 %v969
    %981 = vmatpush.bf16.msra.mxu0 %v968
    %982 = vmatpush.bf16.msra.mxu0 %v967
    %983 = vmatpush.bf16.msra.mxu0 %v966
    %984 = vmatpush.bf16.msra.mxu0 %v965
    %985 = vmatpush.bf16.msra.mxu0 %v964
    %986 = vmatpush.bf16.msra.mxu0 %v963
    %987 = vmatmul.bf16.gmra.mxu0 %v910
    %v988 = vpop.f32.mrf.mxu0
    %v989 = vadd.f32 %v929, %v988
    %v990 = vpop.f32.mrf.mxu0
    %991 = vdwg.mxu0
    %v992 = vpack.c.bf16 %v989, %v989
    %993 = vst [vmem:[#allocation13] sm:$0x1] %v992
    // Predicated region
    $region58: #{tpu_custom_call.1} parent=1 // pred_check
      _
    $region59: #{tpu_custom_call.1} parent=1 // pred_check_branch
      %995 = sbr.rel (0) target = $region61
    $region60: #{tpu_custom_call.1} parent=1 // pred_region
      %997 = vsyncadd [#allocation4], 0
      %s999 = sshll.u32 [#allocation13], 4
      %s1000 = int_to_ptr.vmem [resolvable:$true] %s999
      %s1001 = sshll.u32 %s8, 4
      %s1002 = int_to_ptr.hbm [resolvable:$true] %s1001
      %1004 = dma.vmem_to_hbm [thread:$0]  %s1000, 16, %s1002, [#allocation4]
    $region61: #{tpu_custom_call.1} parent=1 // pred_fallthru
      _
    // Predicated region
    $region62: #{tpu_custom_call.1} parent=1 // pred_check
      _
    $region63: #{tpu_custom_call.1} parent=1 // pred_check_branch
      %1006 = sbr.rel (0) target = $region65
    $region64: #{tpu_custom_call.1} parent=1 // pred_region
      %1008 = dma.done [#allocation4], 16
    $region65: #{tpu_custom_call.1} parent=1 // pred_fallthru
      _
    %1009 = vsyncpa [#allocation3], 1
    %1010 = vsyncpa [#allocation7], 1
    %1011 = vsyncpa [#allocation10], 1
    %1012 = vsyncpa [#allocation4], 1
    %1013 = vsyncpa [#allocation5], 1

</llo_original>
